<compile_context>
chip_gen: v6e
topology: v6e:2x2x1
jax: 0.10.0
libtpu: 0.0.40
codegen_flags: <defaults>
</compile_context>

<pallas_src>
import functools

import numpy as np
import jax
import jax.numpy as jnp
from jax.experimental import pallas as pl
from jax.experimental.pallas import tpu as pltpu

d_input = 3
n_freqs = 10
log_space = True
d_output = d_input * (1 + 2 * n_freqs)          # 63


def _round_up(a, b):
    return ((a + b - 1) // b) * b


def _freq_bands_np():
    if log_space:
        return 2.0 ** np.linspace(0.0, n_freqs - 1, n_freqs)
    return np.linspace(2.0 ** 0.0, 2.0 ** (n_freqs - 1), n_freqs)


_FREQS = tuple(float(f) for f in _freq_bands_np())   # exact powers of two
_ROWS_PAD = _round_up(d_output, 8)                    # 64 (transpose-friendly)


def _posenc_kernel(x_ref, o_ref, xf_ref, rows_ref, *, freqs):
    # x_ref:    (3, TN)  input tile, points lane-dense.
    # o_ref:    (TN, 63) output tile in the module's native [points, features] order.
    # xf_ref:   (30, TN) VMEM scratch: batched sin/cos arguments.
    # rows_ref: (64, TN) VMEM scratch: output rows in reference order (63 used).
    tn = x_ref.shape[1]
    x = x_ref[...].astype(jnp.float32)                       # (3, TN)

    # 1) Batched arguments: rows [f1*x(3), f2*x(3), ..., f10*x(3)].
    #    Plain f32 multiplies (no recurrence / phase tricks) keep args
    #    bit-identical to the reference for the 1e-5 tolerance.
    for j, f in enumerate(freqs):
        xf_ref[d_input * j:d_input * (j + 1), :] = x * f

    # 2) One sin and one cos over the dense (30, TN) block (EUP-batched).
    s = jnp.sin(xf_ref[...])
    c = jnp.cos(xf_ref[...])

    # 3) Assemble output rows in reference order [x | s1 c1 | s2 c2 | ... ].
    rows_ref[0:d_input, :] = x
    for j in range(len(freqs)):
        base = d_input * (1 + 2 * j)
        rows_ref[base:base + d_input, :] = s[d_input * j:d_input * (j + 1), :]
        rows_ref[base + d_input:base + 2 * d_input, :] = \
            c[d_input * j:d_input * (j + 1), :]
    rows_ref[d_output:, :] = jnp.zeros((_ROWS_PAD - d_output, tn), jnp.float32)

    # 4) Per-chunk XLU transpose into the point-major output block.
    CH = 1024
    for c0 in range(0, tn, CH):
        ch = min(CH, tn - c0)
        blk = rows_ref[:, c0:c0 + ch]                         # (64, ch)
        o_ref[c0:c0 + ch, :] = (
            jnp.transpose(blk)[:, :d_output].astype(o_ref.dtype))


@functools.partial(jax.jit, static_argnames=("tn", "out_dtype"))
def positional_encoder(x, *, tn=8192, out_dtype=None):
    """NeRF positional encoding: [..., d_input] -> [..., d_output]."""
    *lead, D = x.shape
    assert D == d_input, f"last dim must be {d_input}, got {D}"
    out_dtype = out_dtype or x.dtype

    x2 = x.reshape(-1, d_input)
    n = x2.shape[0]

    # Lane tile: multiple of 128; capped so small inputs still give >=2 grid
    # steps (keeps both v7x TensorCores busy) and padding stays small.
    cap = _round_up(n, 128)
    if cap >= 256:
        cap = max(128, (cap // 2 // 128) * 128)
    tn_eff = max(128, min(_round_up(tn, 128), cap))
    n_pad = _round_up(n, tn_eff)

    # Lane-dense input layout (points on lanes); cheap 12 B/pt, fused under jit.
    xt = x2.T                                                 # (3, n)
    if n_pad != n:
        xt = jnp.pad(xt, ((0, 0), (0, n_pad - n)))            # elementwise-safe

    kernel = functools.partial(_posenc_kernel, freqs=_FREQS)

    out = pl.pallas_call(
        kernel,
        out_shape=jax.ShapeDtypeStruct((n_pad, d_output), out_dtype),
        grid_spec=pltpu.PrefetchScalarGridSpec(
            num_scalar_prefetch=0,
            grid=(n_pad // tn_eff,),
            in_specs=[pl.BlockSpec((d_input, tn_eff), lambda i: (0, i))],
            out_specs=pl.BlockSpec((tn_eff, d_output), lambda i: (i, 0)),
            scratch_shapes=[
                pltpu.VMEM((n_freqs * d_input, tn_eff), jnp.float32),
                pltpu.VMEM((_ROWS_PAD, tn_eff), jnp.float32),
            ],
        ),
        compiler_params=pltpu.CompilerParams(
            dimension_semantics=("parallel",),
            vmem_limit_bytes=32 * 1024 * 1024,
        ),
    )(xt)

    if n_pad != n:
        out = out[:n]
    return out.reshape(*lead, d_output)


def positional_encoder_ref(x):
    parts = [x]
    for f in _FREQS:
        parts.append(jnp.sin(x * f))
        parts.append(jnp.cos(x * f))
    return jnp.concatenate(parts, axis=-1)


if __name__ == "__main__":
    key = jax.random.PRNGKey(0)

    # Small shape matching the module's forward: N sample points x 3 coords.
    N = 256
    x = jax.random.normal(key, (N, d_input), dtype=jnp.float32)
    out = jax.block_until_ready(positional_encoder(x))
    ref = positional_encoder_ref(x)
    assert out.shape == (N, d_output), out.shape
    assert jnp.allclose(out, ref, atol=1e-5, rtol=1e-5), "mismatch vs reference"

    # Non-multiple-of-128 N exercises the padded-tail path.
    N2 = 1000
    x2 = jax.random.normal(jax.random.PRNGKey(1), (N2, d_input), dtype=jnp.float32)
    out2 = jax.block_until_ready(positional_encoder(x2))
    ref2 = positional_encoder_ref(x2)
    assert out2.shape == (N2, d_output), out2.shape
    assert jnp.allclose(out2, ref2, atol=1e-5, rtol=1e-5), "mismatch vs reference (tail)"

    print("KERNEL_OK")
</pallas_src>

<mosaic_0001>
module attributes {stable_mosaic.version = 11 : i64} {
  func.func @_posenc_kernel(%arg0: i32, %arg1: memref<3x128xf32, #tpu.memory_space<vmem>>, %arg2: memref<128x63xf32, #tpu.memory_space<vmem>>, %arg3: memref<30x128xf32, #tpu.memory_space<vmem>>, %arg4: memref<64x128xf32, #tpu.memory_space<vmem>>) attributes {dimension_semantics = [#tpu.dimension_semantics<parallel>], iteration_bounds = array<i64: 2>, scalar_prefetch = 0 : i64, scratch_operands = 2 : i64, tpu.core_type = #tpu.core_type<tc>, window_params = [{transform_indices = @transform_0, window_bounds = array<i64: 3, 128>}, {transform_indices = @transform_1, window_bounds = array<i64: 128, 63>}]} {
    %c0 = arith.constant 0 : index
    %c0_0 = arith.constant 0 : index
    %0 = vector.load %arg1[%c0, %c0_0] : memref<3x128xf32, #tpu.memory_space<vmem>>, vector<3x128xf32>
    %cst = arith.constant 1.000000e+00 : f32
    %1 = vector.broadcast %cst : f32 to vector<3x128xf32>
    %2 = arith.mulf %0, %1 : vector<3x128xf32>
    %c0_1 = arith.constant 0 : index
    %c0_2 = arith.constant 0 : index
    %3 = vector.load %arg3[%c0_1, %c0_2] : memref<30x128xf32, #tpu.memory_space<vmem>>, vector<3x128xf32>
    tpu.vector_store %arg3[%c0_1, %c0_2], %2 {strides = array<i32>} : memref<30x128xf32, #tpu.memory_space<vmem>>, vector<3x128xf32>,
    %cst_3 = arith.constant 2.000000e+00 : f32
    %4 = vector.broadcast %cst_3 : f32 to vector<3x128xf32>
    %5 = arith.mulf %0, %4 : vector<3x128xf32>
    %c3 = arith.constant 3 : index
    %c0_4 = arith.constant 0 : index
    %6 = vector.load %arg3[%c3, %c0_4] : memref<30x128xf32, #tpu.memory_space<vmem>>, vector<3x128xf32>
    tpu.vector_store %arg3[%c3, %c0_4], %5 {strides = array<i32>} : memref<30x128xf32, #tpu.memory_space<vmem>>, vector<3x128xf32>,
    %cst_5 = arith.constant 4.000000e+00 : f32
    %7 = vector.broadcast %cst_5 : f32 to vector<3x128xf32>
    %8 = arith.mulf %0, %7 : vector<3x128xf32>
    %c6 = arith.constant 6 : index
    %c0_6 = arith.constant 0 : index
    %9 = vector.load %arg3[%c6, %c0_6] : memref<30x128xf32, #tpu.memory_space<vmem>>, vector<3x128xf32>
    tpu.vector_store %arg3[%c6, %c0_6], %8 {strides = array<i32>} : memref<30x128xf32, #tpu.memory_space<vmem>>, vector<3x128xf32>,
    %cst_7 = arith.constant 8.000000e+00 : f32
    %10 = vector.broadcast %cst_7 : f32 to vector<3x128xf32>
    %11 = arith.mulf %0, %10 : vector<3x128xf32>
    %c9 = arith.constant 9 : index
    %c0_8 = arith.constant 0 : index
    %12 = vector.load %arg3[%c9, %c0_8] : memref<30x128xf32, #tpu.memory_space<vmem>>, vector<3x128xf32>
    tpu.vector_store %arg3[%c9, %c0_8], %11 {strides = array<i32>} : memref<30x128xf32, #tpu.memory_space<vmem>>, vector<3x128xf32>,
    %cst_9 = arith.constant 1.600000e+01 : f32
    %13 = vector.broadcast %cst_9 : f32 to vector<3x128xf32>
    %14 = arith.mulf %0, %13 : vector<3x128xf32>
    %c12 = arith.constant 12 : index
    %c0_10 = arith.constant 0 : index
    %15 = vector.load %arg3[%c12, %c0_10] : memref<30x128xf32, #tpu.memory_space<vmem>>, vector<3x128xf32>
    tpu.vector_store %arg3[%c12, %c0_10], %14 {strides = array<i32>} : memref<30x128xf32, #tpu.memory_space<vmem>>, vector<3x128xf32>,
    %cst_11 = arith.constant 3.200000e+01 : f32
    %16 = vector.broadcast %cst_11 : f32 to vector<3x128xf32>
    %17 = arith.mulf %0, %16 : vector<3x128xf32>
    %c15 = arith.constant 15 : index
    %c0_12 = arith.constant 0 : index
    %18 = vector.load %arg3[%c15, %c0_12] : memref<30x128xf32, #tpu.memory_space<vmem>>, vector<3x128xf32>
    tpu.vector_store %arg3[%c15, %c0_12], %17 {strides = array<i32>} : memref<30x128xf32, #tpu.memory_space<vmem>>, vector<3x128xf32>,
    %cst_13 = arith.constant 6.400000e+01 : f32
    %19 = vector.broadcast %cst_13 : f32 to vector<3x128xf32>
    %20 = arith.mulf %0, %19 : vector<3x128xf32>
    %c18 = arith.constant 18 : index
    %c0_14 = arith.constant 0 : index
    %21 = vector.load %arg3[%c18, %c0_14] : memref<30x128xf32, #tpu.memory_space<vmem>>, vector<3x128xf32>
    tpu.vector_store %arg3[%c18, %c0_14], %20 {strides = array<i32>} : memref<30x128xf32, #tpu.memory_space<vmem>>, vector<3x128xf32>,
    %cst_15 = arith.constant 1.280000e+02 : f32
    %22 = vector.broadcast %cst_15 : f32 to vector<3x128xf32>
    %23 = arith.mulf %0, %22 : vector<3x128xf32>
    %c21 = arith.constant 21 : index
    %c0_16 = arith.constant 0 : index
    %24 = vector.load %arg3[%c21, %c0_16] : memref<30x128xf32, #tpu.memory_space<vmem>>, vector<3x128xf32>
    tpu.vector_store %arg3[%c21, %c0_16], %23 {strides = array<i32>} : memref<30x128xf32, #tpu.memory_space<vmem>>, vector<3x128xf32>,
    %cst_17 = arith.constant 2.560000e+02 : f32
    %25 = vector.broadcast %cst_17 : f32 to vector<3x128xf32>
    %26 = arith.mulf %0, %25 : vector<3x128xf32>
    %c24 = arith.constant 24 : index
    %c0_18 = arith.constant 0 : index
    %27 = vector.load %arg3[%c24, %c0_18] : memref<30x128xf32, #tpu.memory_space<vmem>>, vector<3x128xf32>
    tpu.vector_store %arg3[%c24, %c0_18], %26 {strides = array<i32>} : memref<30x128xf32, #tpu.memory_space<vmem>>, vector<3x128xf32>,
    %cst_19 = arith.constant 5.120000e+02 : f32
    %28 = vector.broadcast %cst_19 : f32 to vector<3x128xf32>
    %29 = arith.mulf %0, %28 : vector<3x128xf32>
    %c27 = arith.constant 27 : index
    %c0_20 = arith.constant 0 : index
    %30 = vector.load %arg3[%c27, %c0_20] : memref<30x128xf32, #tpu.memory_space<vmem>>, vector<3x128xf32>
    tpu.vector_store %arg3[%c27, %c0_20], %29 {strides = array<i32>} : memref<30x128xf32, #tpu.memory_space<vmem>>, vector<3x128xf32>,
    %c0_21 = arith.constant 0 : index
    %c0_22 = arith.constant 0 : index
    %31 = vector.load %arg3[%c0_21, %c0_22] : memref<30x128xf32, #tpu.memory_space<vmem>>, vector<30x128xf32>
    %32 = math.sin %31 : vector<30x128xf32>
    %c0_23 = arith.constant 0 : index
    %c0_24 = arith.constant 0 : index
    %33 = vector.load %arg3[%c0_23, %c0_24] : memref<30x128xf32, #tpu.memory_space<vmem>>, vector<30x128xf32>
    %34 = math.cos %33 : vector<30x128xf32>
    %c0_25 = arith.constant 0 : index
    %c0_26 = arith.constant 0 : index
    %35 = vector.load %arg4[%c0_25, %c0_26] : memref<64x128xf32, #tpu.memory_space<vmem>>, vector<3x128xf32>
    tpu.vector_store %arg4[%c0_25, %c0_26], %0 {strides = array<i32>} : memref<64x128xf32, #tpu.memory_space<vmem>>, vector<3x128xf32>,
    %36 = vector.extract_strided_slice %32 {offsets = [0, 0], sizes = [3, 128], strides = [1, 1]} : vector<30x128xf32> to vector<3x128xf32>
    %c3_27 = arith.constant 3 : index
    %c0_28 = arith.constant 0 : index
    %37 = vector.load %arg4[%c3_27, %c0_28] : memref<64x128xf32, #tpu.memory_space<vmem>>, vector<3x128xf32>
    tpu.vector_store %arg4[%c3_27, %c0_28], %36 {strides = array<i32>} : memref<64x128xf32, #tpu.memory_space<vmem>>, vector<3x128xf32>,
    %38 = vector.extract_strided_slice %34 {offsets = [0, 0], sizes = [3, 128], strides = [1, 1]} : vector<30x128xf32> to vector<3x128xf32>
    %c6_29 = arith.constant 6 : index
    %c0_30 = arith.constant 0 : index
    %39 = vector.load %arg4[%c6_29, %c0_30] : memref<64x128xf32, #tpu.memory_space<vmem>>, vector<3x128xf32>
    tpu.vector_store %arg4[%c6_29, %c0_30], %38 {strides = array<i32>} : memref<64x128xf32, #tpu.memory_space<vmem>>, vector<3x128xf32>,
    %40 = vector.extract_strided_slice %32 {offsets = [3, 0], sizes = [3, 128], strides = [1, 1]} : vector<30x128xf32> to vector<3x128xf32>
    %c9_31 = arith.constant 9 : index
    %c0_32 = arith.constant 0 : index
    %41 = vector.load %arg4[%c9_31, %c0_32] : memref<64x128xf32, #tpu.memory_space<vmem>>, vector<3x128xf32>
    tpu.vector_store %arg4[%c9_31, %c0_32], %40 {strides = array<i32>} : memref<64x128xf32, #tpu.memory_space<vmem>>, vector<3x128xf32>,
    %42 = vector.extract_strided_slice %34 {offsets = [3, 0], sizes = [3, 128], strides = [1, 1]} : vector<30x128xf32> to vector<3x128xf32>
    %c12_33 = arith.constant 12 : index
    %c0_34 = arith.constant 0 : index
    %43 = vector.load %arg4[%c12_33, %c0_34] : memref<64x128xf32, #tpu.memory_space<vmem>>, vector<3x128xf32>
    tpu.vector_store %arg4[%c12_33, %c0_34], %42 {strides = array<i32>} : memref<64x128xf32, #tpu.memory_space<vmem>>, vector<3x128xf32>,
    %44 = vector.extract_strided_slice %32 {offsets = [6, 0], sizes = [3, 128], strides = [1, 1]} : vector<30x128xf32> to vector<3x128xf32>
    %c15_35 = arith.constant 15 : index
    %c0_36 = arith.constant 0 : index
    %45 = vector.load %arg4[%c15_35, %c0_36] : memref<64x128xf32, #tpu.memory_space<vmem>>, vector<3x128xf32>
    tpu.vector_store %arg4[%c15_35, %c0_36], %44 {strides = array<i32>} : memref<64x128xf32, #tpu.memory_space<vmem>>, vector<3x128xf32>,
    %46 = vector.extract_strided_slice %34 {offsets = [6, 0], sizes = [3, 128], strides = [1, 1]} : vector<30x128xf32> to vector<3x128xf32>
    %c18_37 = arith.constant 18 : index
    %c0_38 = arith.constant 0 : index
    %47 = vector.load %arg4[%c18_37, %c0_38] : memref<64x128xf32, #tpu.memory_space<vmem>>, vector<3x128xf32>
    tpu.vector_store %arg4[%c18_37, %c0_38], %46 {strides = array<i32>} : memref<64x128xf32, #tpu.memory_space<vmem>>, vector<3x128xf32>,
    %48 = vector.extract_strided_slice %32 {offsets = [9, 0], sizes = [3, 128], strides = [1, 1]} : vector<30x128xf32> to vector<3x128xf32>
    %c21_39 = arith.constant 21 : index
    %c0_40 = arith.constant 0 : index
    %49 = vector.load %arg4[%c21_39, %c0_40] : memref<64x128xf32, #tpu.memory_space<vmem>>, vector<3x128xf32>
    tpu.vector_store %arg4[%c21_39, %c0_40], %48 {strides = array<i32>} : memref<64x128xf32, #tpu.memory_space<vmem>>, vector<3x128xf32>,
    %50 = vector.extract_strided_slice %34 {offsets = [9, 0], sizes = [3, 128], strides = [1, 1]} : vector<30x128xf32> to vector<3x128xf32>
    %c24_41 = arith.constant 24 : index
    %c0_42 = arith.constant 0 : index
    %51 = vector.load %arg4[%c24_41, %c0_42] : memref<64x128xf32, #tpu.memory_space<vmem>>, vector<3x128xf32>
    tpu.vector_store %arg4[%c24_41, %c0_42], %50 {strides = array<i32>} : memref<64x128xf32, #tpu.memory_space<vmem>>, vector<3x128xf32>,
    %52 = vector.extract_strided_slice %32 {offsets = [12, 0], sizes = [3, 128], strides = [1, 1]} : vector<30x128xf32> to vector<3x128xf32>
    %c27_43 = arith.constant 27 : index
    %c0_44 = arith.constant 0 : index
    %53 = vector.load %arg4[%c27_43, %c0_44] : memref<64x128xf32, #tpu.memory_space<vmem>>, vector<3x128xf32>
    tpu.vector_store %arg4[%c27_43, %c0_44], %52 {strides = array<i32>} : memref<64x128xf32, #tpu.memory_space<vmem>>, vector<3x128xf32>,
    %54 = vector.extract_strided_slice %34 {offsets = [12, 0], sizes = [3, 128], strides = [1, 1]} : vector<30x128xf32> to vector<3x128xf32>
    %c30 = arith.constant 30 : index
    %c0_45 = arith.constant 0 : index
    %55 = vector.load %arg4[%c30, %c0_45] : memref<64x128xf32, #tpu.memory_space<vmem>>, vector<3x128xf32>
    tpu.vector_store %arg4[%c30, %c0_45], %54 {strides = array<i32>} : memref<64x128xf32, #tpu.memory_space<vmem>>, vector<3x128xf32>,
    %56 = vector.extract_strided_slice %32 {offsets = [15, 0], sizes = [3, 128], strides = [1, 1]} : vector<30x128xf32> to vector<3x128xf32>
    %c33 = arith.constant 33 : index
    %c0_46 = arith.constant 0 : index
    %57 = vector.load %arg4[%c33, %c0_46] : memref<64x128xf32, #tpu.memory_space<vmem>>, vector<3x128xf32>
    tpu.vector_store %arg4[%c33, %c0_46], %56 {strides = array<i32>} : memref<64x128xf32, #tpu.memory_space<vmem>>, vector<3x128xf32>,
    %58 = vector.extract_strided_slice %34 {offsets = [15, 0], sizes = [3, 128], strides = [1, 1]} : vector<30x128xf32> to vector<3x128xf32>
    %c36 = arith.constant 36 : index
    %c0_47 = arith.constant 0 : index
    %59 = vector.load %arg4[%c36, %c0_47] : memref<64x128xf32, #tpu.memory_space<vmem>>, vector<3x128xf32>
    tpu.vector_store %arg4[%c36, %c0_47], %58 {strides = array<i32>} : memref<64x128xf32, #tpu.memory_space<vmem>>, vector<3x128xf32>,
    %60 = vector.extract_strided_slice %32 {offsets = [18, 0], sizes = [3, 128], strides = [1, 1]} : vector<30x128xf32> to vector<3x128xf32>
    %c39 = arith.constant 39 : index
    %c0_48 = arith.constant 0 : index
    %61 = vector.load %arg4[%c39, %c0_48] : memref<64x128xf32, #tpu.memory_space<vmem>>, vector<3x128xf32>
    tpu.vector_store %arg4[%c39, %c0_48], %60 {strides = array<i32>} : memref<64x128xf32, #tpu.memory_space<vmem>>, vector<3x128xf32>,
    %62 = vector.extract_strided_slice %34 {offsets = [18, 0], sizes = [3, 128], strides = [1, 1]} : vector<30x128xf32> to vector<3x128xf32>
    %c42 = arith.constant 42 : index
    %c0_49 = arith.constant 0 : index
    %63 = vector.load %arg4[%c42, %c0_49] : memref<64x128xf32, #tpu.memory_space<vmem>>, vector<3x128xf32>
    tpu.vector_store %arg4[%c42, %c0_49], %62 {strides = array<i32>} : memref<64x128xf32, #tpu.memory_space<vmem>>, vector<3x128xf32>,
    %64 = vector.extract_strided_slice %32 {offsets = [21, 0], sizes = [3, 128], strides = [1, 1]} : vector<30x128xf32> to vector<3x128xf32>
    %c45 = arith.constant 45 : index
    %c0_50 = arith.constant 0 : index
    %65 = vector.load %arg4[%c45, %c0_50] : memref<64x128xf32, #tpu.memory_space<vmem>>, vector<3x128xf32>
    tpu.vector_store %arg4[%c45, %c0_50], %64 {strides = array<i32>} : memref<64x128xf32, #tpu.memory_space<vmem>>, vector<3x128xf32>,
    %66 = vector.extract_strided_slice %34 {offsets = [21, 0], sizes = [3, 128], strides = [1, 1]} : vector<30x128xf32> to vector<3x128xf32>
    %c48 = arith.constant 48 : index
    %c0_51 = arith.constant 0 : index
    %67 = vector.load %arg4[%c48, %c0_51] : memref<64x128xf32, #tpu.memory_space<vmem>>, vector<3x128xf32>
    tpu.vector_store %arg4[%c48, %c0_51], %66 {strides = array<i32>} : memref<64x128xf32, #tpu.memory_space<vmem>>, vector<3x128xf32>,
    %68 = vector.extract_strided_slice %32 {offsets = [24, 0], sizes = [3, 128], strides = [1, 1]} : vector<30x128xf32> to vector<3x128xf32>
    %c51 = arith.constant 51 : index
    %c0_52 = arith.constant 0 : index
    %69 = vector.load %arg4[%c51, %c0_52] : memref<64x128xf32, #tpu.memory_space<vmem>>, vector<3x128xf32>
    tpu.vector_store %arg4[%c51, %c0_52], %68 {strides = array<i32>} : memref<64x128xf32, #tpu.memory_space<vmem>>, vector<3x128xf32>,
    %70 = vector.extract_strided_slice %34 {offsets = [24, 0], sizes = [3, 128], strides = [1, 1]} : vector<30x128xf32> to vector<3x128xf32>
    %c54 = arith.constant 54 : index
    %c0_53 = arith.constant 0 : index
    %71 = vector.load %arg4[%c54, %c0_53] : memref<64x128xf32, #tpu.memory_space<vmem>>, vector<3x128xf32>
    tpu.vector_store %arg4[%c54, %c0_53], %70 {strides = array<i32>} : memref<64x128xf32, #tpu.memory_space<vmem>>, vector<3x128xf32>,
    %72 = vector.extract_strided_slice %32 {offsets = [27, 0], sizes = [3, 128], strides = [1, 1]} : vector<30x128xf32> to vector<3x128xf32>
    %c57 = arith.constant 57 : index
    %c0_54 = arith.constant 0 : index
    %73 = vector.load %arg4[%c57, %c0_54] : memref<64x128xf32, #tpu.memory_space<vmem>>, vector<3x128xf32>
    tpu.vector_store %arg4[%c57, %c0_54], %72 {strides = array<i32>} : memref<64x128xf32, #tpu.memory_space<vmem>>, vector<3x128xf32>,
    %74 = vector.extract_strided_slice %34 {offsets = [27, 0], sizes = [3, 128], strides = [1, 1]} : vector<30x128xf32> to vector<3x128xf32>
    %c60 = arith.constant 60 : index
    %c0_55 = arith.constant 0 : index
    %75 = vector.load %arg4[%c60, %c0_55] : memref<64x128xf32, #tpu.memory_space<vmem>>, vector<3x128xf32>
    tpu.vector_store %arg4[%c60, %c0_55], %74 {strides = array<i32>} : memref<64x128xf32, #tpu.memory_space<vmem>>, vector<3x128xf32>,
    %cst_56 = arith.constant 0.000000e+00 : f32
    %76 = vector.broadcast %cst_56 : f32 to vector<1x128xf32>
    %c63 = arith.constant 63 : index
    %c0_57 = arith.constant 0 : index
    %77 = vector.load %arg4[%c63, %c0_57] : memref<64x128xf32, #tpu.memory_space<vmem>>, vector<1x128xf32>
    tpu.vector_store %arg4[%c63, %c0_57], %76 {strides = array<i32>} : memref<64x128xf32, #tpu.memory_space<vmem>>, vector<1x128xf32>,
    %c0_58 = arith.constant 0 : index
    %c0_59 = arith.constant 0 : index
    %78 = vector.load %arg4[%c0_58, %c0_59] : memref<64x128xf32, #tpu.memory_space<vmem>>, vector<64x128xf32>
    %79 = tpu.transpose %78, [1, 0] : vector<64x128xf32> -> vector<128x64xf32>
    %80 = vector.extract_strided_slice %79 {offsets = [0, 0], sizes = [128, 63], strides = [1, 1]} : vector<128x64xf32> to vector<128x63xf32>
    %c0_60 = arith.constant 0 : index
    %c0_61 = arith.constant 0 : index
    %81 = vector.load %arg2[%c0_60, %c0_61] : memref<128x63xf32, #tpu.memory_space<vmem>>, vector<128x63xf32>
    tpu.vector_store %arg2[%c0_60, %c0_61], %80 {strides = array<i32>} : memref<128x63xf32, #tpu.memory_space<vmem>>, vector<128x63xf32>,
    return
  }
  func.func @transform_0(%arg0: i32) -> (i32, i32) {
    %c0_i32 = arith.constant 0 : i32
    %c0_i32_0 = arith.constant 0 : i32
    return %c0_i32, %arg0 : i32, i32
  }
  func.func @transform_1(%arg0: i32) -> (i32, i32) {
    %c0_i32 = arith.constant 0 : i32
    %c0_i32_0 = arith.constant 0 : i32
    return %arg0, %c0_i32 : i32, i32
  }
}

</mosaic_0001>

<llo_original>
// kernel: positional_encoder.1
$region0: #{positional_encoder.1}
  #allocation0 [shape = 'u32[]', space=smem, size = 0x4, offset = 0x4, fixed_abs, tag = 'smem constant byte address 0x4 - core index']
  #allocation1 [shape = 'u32[144,128]{1,0:T(1,128)}', space=vmem, size = 0x12000, scoped, tag = 'internal scratch']
  #allocation2 [shape = 'f32[30,128]{1,0:T(8,128)}', space=vmem, size = 0x4000, scoped, tag = 'scratch operand']
  #allocation3 [shape = 'f32[64,128]{1,0:T(8,128)}', space=vmem, size = 0x8000, scoped, tag = 'scratch operand']
  %s0 = inlined_call_operand.hbm [shape: f32[3,256], index: 0, kind: input, shape index: {}]
  %s1 = inlined_call_operand.vmem [shape: f32[256,63], index: 1, kind: output, shape index: {}]
  %s2 = sld [smem:[#allocation0]]
  $region41: #{positional_encoder.1} parent=0
    _
  %s4 = ssub.s32 1, %s2
  %s5 = scalar_select 0, %s4, %s2
  $region1: #{positional_encoder.1} parent=0
    #allocation4 [shape = 'u8[4096]{0}', space=vmem, size = 0x1000, scoped, tag = 'input window, operand 0']
    #allocation5 [shape = 's32[2]{0}', space=sflag, size = 0x8, scoped, tag = 'scoped memory for positional_encoder.1']
    %6 = vsyncpa [#allocation5], 0
    %s7 = scalar_lea.sflag [#allocation5], 1
    %8 = vsyncpa %s7, 0
    loop: start=0, step=1, limit=4
    $region2: #{positional_encoder.1} parent=1 // loop_pre_header
      _
    $region3: #{positional_encoder.1} parent=1 // loop_header
      %s10 = sphi 0, %s14
      %p11 = scmp.ge.s32.totalorder %s10, 4
      %s20 = sphi 0, %s22
      %s23 = sphi 0, %s20
      %s24 = sphi 0, %s23
      %s40 = sphi 0, %s24
      %s46 = sphi 0, %s48
      %s49 = sphi 0, %s46
      %s50 = sphi 0, %s49
      %s66 = sphi 0, %s50
    $region4: #{positional_encoder.1} parent=1 // loop_header_branch
      %13 = sbr.rel (%p11) target = $region8
    $region5: #{positional_encoder.1} parent=1 // loop_body
      %s15 = ssub.s32 %s10, 1
      %s16 = ssub.s32 %s10, 2
      %s17 = sadd.s32 %s10, 1
      %s18 = ssub.s32 %s10, %s17
      %p19 = scmp.eq.s32.totalorder %s18, 0
      %s21 = sadd.s32 %s20, 1
      %s22 = scalar_select %p19, %s20, %s21
      %p25 = pneg %p19
      %p26 = scmp.eq.s32.totalorder %s10, 1
      %p27 = por %p25, %p26
      %p28 = scmp.ne.s32.totalorder %s20, %s23
      %p29 = scmp.eq.s32.totalorder %s10, 0
      %p30 = por %p28, %p29
      %p31 = scmp.ne.s32.totalorder %s20, %s23
      %p32 = scmp.eq.s32.totalorder %s15, 1
      %p33 = por %p31, %p32
      %p34 = scmp.ne.s32.totalorder %s23, %s24
      %p35 = scmp.eq.s32.totalorder %s15, 0
      %p36 = por %p34, %p35
      %p37 = scmp.ne.s32.totalorder %s23, %s24
      %p38 = scmp.eq.s32.totalorder %s16, 1
      %p39 = por %p37, %p38
      %p41 = scmp.ne.s32.totalorder %s24, %s40
      %p42 = scmp.eq.s32.totalorder %s16, 0
      %p43 = por %p41, %p42
      %s44 = ssub.s32 %s10, %s17
      %p45 = scmp.eq.s32.totalorder %s44, 0
      %s47 = sadd.s32 %s46, 1
      %s48 = scalar_select %p45, %s46, %s47
      %p51 = pneg %p45
      %p52 = scmp.eq.s32.totalorder %s10, 1
      %p53 = por %p51, %p52
      %p54 = scmp.ne.s32.totalorder %s46, %s49
      %p55 = scmp.eq.s32.totalorder %s10, 0
      %p56 = por %p54, %p55
      %p57 = scmp.ne.s32.totalorder %s46, %s49
      %p58 = scmp.eq.s32.totalorder %s15, 1
      %p59 = por %p57, %p58
      %p60 = scmp.ne.s32.totalorder %s49, %s50
      %p61 = scmp.eq.s32.totalorder %s15, 0
      %p62 = por %p60, %p61
      %p63 = scmp.ne.s32.totalorder %s49, %s50
      %p64 = scmp.eq.s32.totalorder %s16, 1
      %p65 = por %p63, %p64
      %p67 = scmp.ne.s32.totalorder %s50, %s66
      %p68 = scmp.eq.s32.totalorder %s16, 0
      %p69 = por %p67, %p68
      %p70 = scmp.le.s32.totalorder 1, %s10
      %p71 = scmp.lt.s32.totalorder %s10, 3
      %p72 = pnand %p70, %p71
      %p73 = pneg %p72
      // Predicated region
      $region9: #{positional_encoder.1} parent=5 // pred_check
        _
      $region10: #{positional_encoder.1} parent=5 // pred_check_branch
        %75 = sbr.rel (%p72) target = $region12
      $region11: #{positional_encoder.1} parent=5 // pred_region
        %s76 = ssub.s32 %s10, 1
      $region12: #{positional_encoder.1} parent=5 // pred_fallthru
        _
      %p77 = scmp.lt.s32.totalorder %s10, 2
      // Predicated region
      $region13: #{positional_encoder.1} parent=5 // pred_check
        %p78 = pneg %p77
      $region14: #{positional_encoder.1} parent=5 // pred_check_branch
        %80 = sbr.rel (%p78) target = $region16
      $region15: #{positional_encoder.1} parent=5 // pred_region
        // Predicated region
        $region17: #{positional_encoder.1} parent=15 // pred_check
          %p81 = pneg %p30
        $region18: #{positional_encoder.1} parent=15 // pred_check_branch
          %83 = sbr.rel (%p81) target = $region20
        $region19: #{positional_encoder.1} parent=15 // pred_region
          %s84 = sand.u32 %s20, 1
          %s85 = scalar_lea.sflag [#allocation5], %s84
          %s86 = sand.u32 %s20, 1
          %s87 = smul.addr %s86, 4
          %s88 = scalar_lea.vmem [#allocation4], %s87
          %s90 = ssub.s32 64, 64
          %91 = vsyncadd %s85, %s90
          %s92 = smul.addr %s10, 64
          %s93 = scalar_lea.hbm %s0, %s92
          %s95 = sshll.u32 %s88, 4
          %s96 = int_to_ptr.vmem [resolvable:$true] %s95
          %98 = dma.hbm_to_vmem [thread:$0]  %s93, 64, %s96, %s85
        $region20: #{positional_encoder.1} parent=15 // pred_fallthru
          _
      $region16: #{positional_encoder.1} parent=5 // pred_fallthru
        _
      %p99 = scmp.le.s32.totalorder 1, %s10
      %p100 = scmp.lt.s32.totalorder %s10, 3
      %p101 = pnand %p99, %p100
      %p102 = pneg %p101
      // Predicated region
      $region21: #{positional_encoder.1} parent=5 // pred_check
        _
      $region22: #{positional_encoder.1} parent=5 // pred_check_branch
        %104 = sbr.rel (%p101) target = $region24
      $region23: #{positional_encoder.1} parent=5 // pred_region
        %s105 = ssub.s32 %s10, 1
        %s106 = sand.u32 %s23, 1
        %s107 = scalar_lea.sflag [#allocation5], %s106
        %s108 = sand.u32 %s23, 1
        %s109 = smul.addr %s108, 4
        %s110 = scalar_lea.vmem [#allocation4], %s109
        // Predicated region
        $region25: #{positional_encoder.1} parent=23 // pred_check
          %p111 = pneg %p36
        $region26: #{positional_encoder.1} parent=23 // pred_check_branch
          %113 = sbr.rel (%p111) target = $region28
        $region27: #{positional_encoder.1} parent=23 // pred_region
          %114 = dma.done %s107, 64
        $region28: #{positional_encoder.1} parent=23 // pred_fallthru
          _
        %s115 = sand.u32 %s23, 1
        %s116 = scalar_lea.sflag [#allocation5], %s115
        %s117 = sand.u32 %s23, 1
        %s118 = smul.addr %s117, 4
        %s119 = scalar_lea.vmem [#allocation4], %s118
        %p120 = pneg %p36
        %p121 = pneg %p33
        %p122 = pneg %p62
        %p123 = pneg %p59
        %s124 = smul.u32 16, %s15
        %p125 = scmp.lt.s32.totalorder %s124, 31
        %s126 = scalar_select %p125, %s124, 31
        %s127 = smul.addr %s126, 8
        %s128 = scalar_lea.vmem %s1, %s127
        %s129 = smul.u32 16, %s15
        %p130 = scmp.lt.s32.totalorder %s129, 31
        %s131 = scalar_select %p130, %s129, 31
        %s132 = smul.addr %s131, 8
        %s133 = scalar_lea.vmem %s1, %s132
        %s134 = smul.u32 16, %s15
        %v135 = vld [vmem:[%s110] sm:$0x7]
        %136 = vst [vmem:[#allocation2] sm:$0x7] %v135
        %v137 = vmul.f32 %v135, 2.0
        %138 = vst [vmem:[#allocation2 + $0x3] sm:$0x7] %v137
        %v139 = vmul.f32 %v135, 4.0
        %140 = vst [vmem:[#allocation2 + $0x6] sm:$0x7] %v139
        %v141 = vmul.f32 %v135, 8.0
        %142 = vst [vmem:[#allocation2 + $0x9] sm:$0x7] %v141
        %v143 = vmul.f32 %v135, 16.0
        %144 = vst [vmem:[#allocation2 + $0xc] sm:$0x7] %v143
        %v145 = vmul.f32 %v135, 32.0
        %146 = vst [vmem:[#allocation2 + $0xf] sm:$0x7] %v145
        %v147 = vmul.f32 %v135, 64.0
        %148 = vst [vmem:[#allocation2 + $0x12] sm:$0x7] %v147
        %v149 = vmul.f32 %v135, 128.0
        %150 = vst [vmem:[#allocation2 + $0x15] sm:$0x7] %v149
        %v151 = vmul.f32 %v135, 256.0
        %152 = vst [vmem:[#allocation2 + $0x18] sm:$0x7] %v151
        %v153 = vmul.f32 %v135, 512.0
        %154 = vst [vmem:[#allocation2 + $0x1b] sm:$0x7] %v153
        %v155 = vld [vmem:[#allocation2] sm:$0xff]
        %v156 = vld [vmem:[#allocation2 + $0x8] sm:$0xff]
        %v157 = vld [vmem:[#allocation2 + $0x10] sm:$0xff]
        %v158 = vld [vmem:[#allocation2 + $0x18] sm:$0x3f]
        %v159 = vand.u32 2147483647, %v155
        %vm160 = vcmp.le.f32.partialorder %v159, 0.7853982
        %vm161 = vcmp.lt.s32.totalorder %v155, 0
        %v162 = vand.u32 %v155, 2139095040
        %v163 = vshrl.u32 %v162, 23
        %v164 = vsub.s32 %v163, 127
        %v165 = vand.u32 2147483647, %v155
        %v166 = vand.u32 %v165, 8388607
        %v167 = vor.u32 %v166, 8388608
        %v168 = vsub.s32 0, %v167
        %v169 = vadd.s32 %v164, 1
        %vm170 = vcmp.gt.s32.totalorder %v169, 0
        %v171 = vsel %vm170, %v169, 0
        %v172 = vshrl.u32 %v171, 5
        %v173 = vand.u32 %v171, 31
        %v174 = vsub.s32 32, %v173
        %v175 = vshrl.u32 683565275, %v174
        %v176 = vshll.u32 683565275, %v173
        %v177 = vshrl.u32 2475754826, %v174
        %v178 = vor.u32 %v176, %v177
        %v179 = vshll.u32 2475754826, %v173
        %v180 = vshrl.u32 2131351028, %v174
        %v181 = vor.u32 %v179, %v180
        %v182 = vshll.u32 2131351028, %v173
        %v183 = vshrl.u32 2102212464, %v174
        %v184 = vor.u32 %v182, %v183
        %v185 = vshll.u32 2102212464, %v173
        %v186 = vshrl.u32 920167782, %v174
        %v187 = vor.u32 %v185, %v186
        %v188 = vshll.u32 920167782, %v173
        %v189 = vshrl.u32 1326507024, %v174
        %v190 = vor.u32 %v188, %v189
        %vm191 = vcmp.lt.s32.totalorder %v172, 1
        %vm192 = vcmp.lt.s32.totalorder %v172, 2
        %vm193 = vcmp.lt.s32.totalorder %v172, 3
        %vm194 = vcmp.lt.s32.totalorder %v172, 4
        %v195 = vsel %vm191, %v175, %v178
        %v196 = vsel %vm194, %v184, 2102212464
        %v197 = vsel %vm193, %v181, %v196
        %v198 = vsel %vm192, %v195, %v197
        %v199 = vsel %vm191, %v178, %v181
        %v200 = vsel %vm194, %v187, 920167782
        %v201 = vsel %vm193, %v184, %v200
        %v202 = vsel %vm192, %v199, %v201
        %v203 = vsel %vm191, %v181, %v184
        %v204 = vsel %vm194, %v190, 1326507024
        %v205 = vsel %vm193, %v187, %v204
        %v206 = vsel %vm192, %v203, %v205
        %v207 = vshll.u32 %v167, 8
        %v208 = vmul.u32.u64.compose %v207, %v206
        %v209 = vextract.low.u32 %v208
        %v210 = vextract.high.u32 %v208
        %v211 = vmul.u32.u64.compose %v207, %v202
        %v212 = vextract.low.u32 %v211
        %v213 = vextract.high.u32 %v211
        %v214 = vmul.u32 %v207, %v198
        %v215 = vadd.s32 %v210, %v212
        %vm216 = vc.u32 %v210, %v212
        %v217 = vadd.s32 %v213, 1
        %v218 = vsel %vm216, %v217, %v213
        %v219 = vadd.s32 %v214, %v218
        %v220 = vadd.s32 %v219, 536870912
        %v221 = vshrl.u32 %v220, 30
        %v222 = vshll.u32 %v221, 30
        %v223 = vsub.s32 %v219, %v222
        %vm224 = vcmp.lt.s32.totalorder %v223, 0
        %v225 = vsub.s32 0, %v223
        %v226 = vsel %vm224, %v225, %v223
        %v227 = vclz %v226
        %v228 = vsub.s32 %v227, 2
        %vm229 = vcmp.gt.s32.totalorder 0, %v228
        %v230 = vsel %vm229, 0, %v228
        %v231 = vsub.s32 32, %v230
        %v232 = vshll.u32 %v223, %v230
        %v233 = vshrl.u32 %v215, %v231
        %v234 = vor.u32 %v232, %v233
        %v235 = vsub.s32 4294967266, %v230
        %v236 = vadd.s32 %v235, 127
        %v237 = vshll.u32 %v236, 23
        %v238 = vor.u32 4788187, %v237
        %v239 = vand.u32 2147483647, %v238
        %v241 = vcvt.s32.f32 %v234
        %v242 = vmul.f32 %v241, %v239
        %v243 = vxor.u32 %v242, 2147483648
        %v244 = vsel %vm161, %v243, %v242
        %v245 = vsub.s32 4, %v221
        %v246 = vsel %vm161, %v245, %v221
        %v247 = vsel %vm160, %v155, %v244
        %v248 = vsel %vm160, 0, %v246
        %v249 = vcosq.f32.pop %v247
        %v250 = vsinq.f32.pop %v247
        %vm251 = vweird.f32 %v155
        %v252 = vadd.s32 %v248, 3
        %v253 = vand.u32 %v252, 3
        %vm254 = vcmp.lt.s32.totalorder %v253, 2
        %vm255 = vcmp.eq.s32.totalorder %v253, 0
        %v256 = vxor.u32 %v250, 2147483648
        %v257 = vsel %vm255, %v249, %v256
        %vm258 = vcmp.eq.s32.totalorder %v253, 2
        %v259 = vxor.u32 %v249, 2147483648
        %v260 = vsel %vm258, %v259, %v250
        %v261 = vsel %vm254, %v257, %v260
        %v262 = vsel %vm251, nan, %v261
        %v263 = vand.u32 2147483647, %v156
        %vm264 = vcmp.le.f32.partialorder %v263, 0.7853982
        %vm265 = vcmp.lt.s32.totalorder %v156, 0
        %v266 = vand.u32 %v156, 2139095040
        %v267 = vshrl.u32 %v266, 23
        %v268 = vsub.s32 %v267, 127
        %v269 = vand.u32 2147483647, %v156
        %v270 = vand.u32 %v269, 8388607
        %v271 = vor.u32 %v270, 8388608
        %v272 = vsub.s32 0, %v271
        %v273 = vadd.s32 %v268, 1
        %vm274 = vcmp.gt.s32.totalorder %v273, 0
        %v275 = vsel %vm274, %v273, 0
        %v276 = vshrl.u32 %v275, 5
        %v277 = vand.u32 %v275, 31
        %v278 = vsub.s32 32, %v277
        %v279 = vshrl.u32 683565275, %v278
        %v280 = vshll.u32 683565275, %v277
        %v281 = vshrl.u32 2475754826, %v278
        %v282 = vor.u32 %v280, %v281
        %v283 = vshll.u32 2475754826, %v277
        %v284 = vshrl.u32 2131351028, %v278
        %v285 = vor.u32 %v283, %v284
        %v286 = vshll.u32 2131351028, %v277
        %v287 = vshrl.u32 2102212464, %v278
        %v288 = vor.u32 %v286, %v287
        %v289 = vshll.u32 2102212464, %v277
        %v290 = vshrl.u32 920167782, %v278
        %v291 = vor.u32 %v289, %v290
        %v292 = vshll.u32 920167782, %v277
        %v293 = vshrl.u32 1326507024, %v278
        %v294 = vor.u32 %v292, %v293
        %vm295 = vcmp.lt.s32.totalorder %v276, 1
        %vm296 = vcmp.lt.s32.totalorder %v276, 2
        %vm297 = vcmp.lt.s32.totalorder %v276, 3
        %vm298 = vcmp.lt.s32.totalorder %v276, 4
        %v299 = vsel %vm295, %v279, %v282
        %v300 = vsel %vm298, %v288, 2102212464
        %v301 = vsel %vm297, %v285, %v300
        %v302 = vsel %vm296, %v299, %v301
        %v303 = vsel %vm295, %v282, %v285
        %v304 = vsel %vm298, %v291, 920167782
        %v305 = vsel %vm297, %v288, %v304
        %v306 = vsel %vm296, %v303, %v305
        %v307 = vsel %vm295, %v285, %v288
        %v308 = vsel %vm298, %v294, 1326507024
        %v309 = vsel %vm297, %v291, %v308
        %v310 = vsel %vm296, %v307, %v309
        %v311 = vshll.u32 %v271, 8
        %v312 = vmul.u32.u64.compose %v311, %v310
        %v313 = vextract.low.u32 %v312
        %v314 = vextract.high.u32 %v312
        %v315 = vmul.u32.u64.compose %v311, %v306
        %v316 = vextract.low.u32 %v315
        %v317 = vextract.high.u32 %v315
        %v318 = vmul.u32 %v311, %v302
        %v319 = vadd.s32 %v314, %v316
        %vm320 = vc.u32 %v314, %v316
        %v321 = vadd.s32 %v317, 1
        %v322 = vsel %vm320, %v321, %v317
        %v323 = vadd.s32 %v318, %v322
        %v324 = vadd.s32 %v323, 536870912
        %v325 = vshrl.u32 %v324, 30
        %v326 = vshll.u32 %v325, 30
        %v327 = vsub.s32 %v323, %v326
        %vm328 = vcmp.lt.s32.totalorder %v327, 0
        %v329 = vsub.s32 0, %v327
        %v330 = vsel %vm328, %v329, %v327
        %v331 = vclz %v330
        %v332 = vsub.s32 %v331, 2
        %vm333 = vcmp.gt.s32.totalorder 0, %v332
        %v334 = vsel %vm333, 0, %v332
        %v335 = vsub.s32 32, %v334
        %v336 = vshll.u32 %v327, %v334
        %v337 = vshrl.u32 %v319, %v335
        %v338 = vor.u32 %v336, %v337
        %v339 = vsub.s32 4294967266, %v334
        %v340 = vadd.s32 %v339, 127
        %v341 = vshll.u32 %v340, 23
        %v342 = vor.u32 4788187, %v341
        %v343 = vand.u32 2147483647, %v342
        %v345 = vcvt.s32.f32 %v338
        %v346 = vmul.f32 %v345, %v343
        %v347 = vxor.u32 %v346, 2147483648
        %v348 = vsel %vm265, %v347, %v346
        %v349 = vsub.s32 4, %v325
        %v350 = vsel %vm265, %v349, %v325
        %v351 = vsel %vm264, %v156, %v348
        %v352 = vsel %vm264, 0, %v350
        %v353 = vcosq.f32.pop %v351
        %v354 = vsinq.f32.pop %v351
        %vm355 = vweird.f32 %v156
        %v356 = vadd.s32 %v352, 3
        %v357 = vand.u32 %v356, 3
        %vm358 = vcmp.lt.s32.totalorder %v357, 2
        %vm359 = vcmp.eq.s32.totalorder %v357, 0
        %v360 = vxor.u32 %v354, 2147483648
        %v361 = vsel %vm359, %v353, %v360
        %vm362 = vcmp.eq.s32.totalorder %v357, 2
        %v363 = vxor.u32 %v353, 2147483648
        %v364 = vsel %vm362, %v363, %v354
        %v365 = vsel %vm358, %v361, %v364
        %v366 = vsel %vm355, nan, %v365
        %v367 = vand.u32 2147483647, %v157
        %vm368 = vcmp.le.f32.partialorder %v367, 0.7853982
        %vm369 = vcmp.lt.s32.totalorder %v157, 0
        %v370 = vand.u32 %v157, 2139095040
        %v371 = vshrl.u32 %v370, 23
        %v372 = vsub.s32 %v371, 127
        %v373 = vand.u32 2147483647, %v157
        %v374 = vand.u32 %v373, 8388607
        %v375 = vor.u32 %v374, 8388608
        %v376 = vsub.s32 0, %v375
        %v377 = vadd.s32 %v372, 1
        %vm378 = vcmp.gt.s32.totalorder %v377, 0
        %v379 = vsel %vm378, %v377, 0
        %v380 = vshrl.u32 %v379, 5
        %v381 = vand.u32 %v379, 31
        %v382 = vsub.s32 32, %v381
        %v383 = vshrl.u32 683565275, %v382
        %v384 = vshll.u32 683565275, %v381
        %v385 = vshrl.u32 2475754826, %v382
        %v386 = vor.u32 %v384, %v385
        %v387 = vshll.u32 2475754826, %v381
        %v388 = vshrl.u32 2131351028, %v382
        %v389 = vor.u32 %v387, %v388
        %v390 = vshll.u32 2131351028, %v381
        %v391 = vshrl.u32 2102212464, %v382
        %v392 = vor.u32 %v390, %v391
        %v393 = vshll.u32 2102212464, %v381
        %v394 = vshrl.u32 920167782, %v382
        %v395 = vor.u32 %v393, %v394
        %v396 = vshll.u32 920167782, %v381
        %v397 = vshrl.u32 1326507024, %v382
        %v398 = vor.u32 %v396, %v397
        %vm399 = vcmp.lt.s32.totalorder %v380, 1
        %vm400 = vcmp.lt.s32.totalorder %v380, 2
        %vm401 = vcmp.lt.s32.totalorder %v380, 3
        %vm402 = vcmp.lt.s32.totalorder %v380, 4
        %v403 = vsel %vm399, %v383, %v386
        %v404 = vsel %vm402, %v392, 2102212464
        %v405 = vsel %vm401, %v389, %v404
        %v406 = vsel %vm400, %v403, %v405
        %v407 = vsel %vm399, %v386, %v389
        %v408 = vsel %vm402, %v395, 920167782
        %v409 = vsel %vm401, %v392, %v408
        %v410 = vsel %vm400, %v407, %v409
        %v411 = vsel %vm399, %v389, %v392
        %v412 = vsel %vm402, %v398, 1326507024
        %v413 = vsel %vm401, %v395, %v412
        %v414 = vsel %vm400, %v411, %v413
        %v415 = vshll.u32 %v375, 8
        %v416 = vmul.u32.u64.compose %v415, %v414
        %v417 = vextract.low.u32 %v416
        %v418 = vextract.high.u32 %v416
        %v419 = vmul.u32.u64.compose %v415, %v410
        %v420 = vextract.low.u32 %v419
        %v421 = vextract.high.u32 %v419
        %v422 = vmul.u32 %v415, %v406
        %v423 = vadd.s32 %v418, %v420
        %vm424 = vc.u32 %v418, %v420
        %v425 = vadd.s32 %v421, 1
        %v426 = vsel %vm424, %v425, %v421
        %v427 = vadd.s32 %v422, %v426
        %v428 = vadd.s32 %v427, 536870912
        %v429 = vshrl.u32 %v428, 30
        %v430 = vshll.u32 %v429, 30
        %v431 = vsub.s32 %v427, %v430
        %vm432 = vcmp.lt.s32.totalorder %v431, 0
        %v433 = vsub.s32 0, %v431
        %v434 = vsel %vm432, %v433, %v431
        %v435 = vclz %v434
        %v436 = vsub.s32 %v435, 2
        %vm437 = vcmp.gt.s32.totalorder 0, %v436
        %v438 = vsel %vm437, 0, %v436
        %v439 = vsub.s32 32, %v438
        %v440 = vshll.u32 %v431, %v438
        %v441 = vshrl.u32 %v423, %v439
        %v442 = vor.u32 %v440, %v441
        %v443 = vsub.s32 4294967266, %v438
        %v444 = vadd.s32 %v443, 127
        %v445 = vshll.u32 %v444, 23
        %v446 = vor.u32 4788187, %v445
        %v447 = vand.u32 2147483647, %v446
        %v449 = vcvt.s32.f32 %v442
        %v450 = vmul.f32 %v449, %v447
        %v451 = vxor.u32 %v450, 2147483648
        %v452 = vsel %vm369, %v451, %v450
        %v453 = vsub.s32 4, %v429
        %v454 = vsel %vm369, %v453, %v429
        %v455 = vsel %vm368, %v157, %v452
        %v456 = vsel %vm368, 0, %v454
        %v457 = vcosq.f32.pop %v455
        %v458 = vsinq.f32.pop %v455
        %vm459 = vweird.f32 %v157
        %v460 = vadd.s32 %v456, 3
        %v461 = vand.u32 %v460, 3
        %vm462 = vcmp.lt.s32.totalorder %v461, 2
        %vm463 = vcmp.eq.s32.totalorder %v461, 0
        %v464 = vxor.u32 %v458, 2147483648
        %v465 = vsel %vm463, %v457, %v464
        %vm466 = vcmp.eq.s32.totalorder %v461, 2
        %v467 = vxor.u32 %v457, 2147483648
        %v468 = vsel %vm466, %v467, %v458
        %v469 = vsel %vm462, %v465, %v468
        %v470 = vsel %vm459, nan, %v469
        %v471 = vand.u32 2147483647, %v158
        %vm472 = vcmp.le.f32.partialorder %v471, 0.7853982
        %vm473 = vcmp.lt.s32.totalorder %v158, 0
        %v474 = vand.u32 %v158, 2139095040
        %v475 = vshrl.u32 %v474, 23
        %v476 = vsub.s32 %v475, 127
        %v477 = vand.u32 2147483647, %v158
        %v478 = vand.u32 %v477, 8388607
        %v479 = vor.u32 %v478, 8388608
        %v480 = vsub.s32 0, %v479
        %v481 = vadd.s32 %v476, 1
        %vm482 = vcmp.gt.s32.totalorder %v481, 0
        %v483 = vsel %vm482, %v481, 0
        %v484 = vshrl.u32 %v483, 5
        %v485 = vand.u32 %v483, 31
        %v486 = vsub.s32 32, %v485
        %v487 = vshrl.u32 683565275, %v486
        %v488 = vshll.u32 683565275, %v485
        %v489 = vshrl.u32 2475754826, %v486
        %v490 = vor.u32 %v488, %v489
        %v491 = vshll.u32 2475754826, %v485
        %v492 = vshrl.u32 2131351028, %v486
        %v493 = vor.u32 %v491, %v492
        %v494 = vshll.u32 2131351028, %v485
        %v495 = vshrl.u32 2102212464, %v486
        %v496 = vor.u32 %v494, %v495
        %v497 = vshll.u32 2102212464, %v485
        %v498 = vshrl.u32 920167782, %v486
        %v499 = vor.u32 %v497, %v498
        %v500 = vshll.u32 920167782, %v485
        %v501 = vshrl.u32 1326507024, %v486
        %v502 = vor.u32 %v500, %v501
        %vm503 = vcmp.lt.s32.totalorder %v484, 1
        %vm504 = vcmp.lt.s32.totalorder %v484, 2
        %vm505 = vcmp.lt.s32.totalorder %v484, 3
        %vm506 = vcmp.lt.s32.totalorder %v484, 4
        %v507 = vsel %vm503, %v487, %v490
        %v508 = vsel %vm506, %v496, 2102212464
        %v509 = vsel %vm505, %v493, %v508
        %v510 = vsel %vm504, %v507, %v509
        %v511 = vsel %vm503, %v490, %v493
        %v512 = vsel %vm506, %v499, 920167782
        %v513 = vsel %vm505, %v496, %v512
        %v514 = vsel %vm504, %v511, %v513
        %v515 = vsel %vm503, %v493, %v496
        %v516 = vsel %vm506, %v502, 1326507024
        %v517 = vsel %vm505, %v499, %v516
        %v518 = vsel %vm504, %v515, %v517
        %v519 = vshll.u32 %v479, 8
        %v520 = vmul.u32.u64.compose %v519, %v518
        %v521 = vextract.low.u32 %v520
        %v522 = vextract.high.u32 %v520
        %v523 = vmul.u32.u64.compose %v519, %v514
        %v524 = vextract.low.u32 %v523
        %v525 = vextract.high.u32 %v523
        %v526 = vmul.u32 %v519, %v510
        %v527 = vadd.s32 %v522, %v524
        %vm528 = vc.u32 %v522, %v524
        %v529 = vadd.s32 %v525, 1
        %v530 = vsel %vm528, %v529, %v525
        %v531 = vadd.s32 %v526, %v530
        %v532 = vadd.s32 %v531, 536870912
        %v533 = vshrl.u32 %v532, 30
        %v534 = vshll.u32 %v533, 30
        %v535 = vsub.s32 %v531, %v534
        %vm536 = vcmp.lt.s32.totalorder %v535, 0
        %v537 = vsub.s32 0, %v535
        %v538 = vsel %vm536, %v537, %v535
        %v539 = vclz %v538
        %v540 = vsub.s32 %v539, 2
        %vm541 = vcmp.gt.s32.totalorder 0, %v540
        %v542 = vsel %vm541, 0, %v540
        %v543 = vsub.s32 32, %v542
        %v544 = vshll.u32 %v535, %v542
        %v545 = vshrl.u32 %v527, %v543
        %v546 = vor.u32 %v544, %v545
        %v547 = vsub.s32 4294967266, %v542
        %v548 = vadd.s32 %v547, 127
        %v549 = vshll.u32 %v548, 23
        %v550 = vor.u32 4788187, %v549
        %v551 = vand.u32 2147483647, %v550
        %v553 = vcvt.s32.f32 %v546
        %v554 = vmul.f32 %v553, %v551
        %v555 = vxor.u32 %v554, 2147483648
        %v556 = vsel %vm473, %v555, %v554
        %v557 = vsub.s32 4, %v533
        %v558 = vsel %vm473, %v557, %v533
        %v559 = vsel %vm472, %v158, %v556
        %v560 = vsel %vm472, 0, %v558
        %v561 = vcosq.f32.pop %v559
        %v562 = vsinq.f32.pop %v559
        %vm563 = vweird.f32 %v158
        %v564 = vadd.s32 %v560, 3
        %v565 = vand.u32 %v564, 3
        %vm566 = vcmp.lt.s32.totalorder %v565, 2
        %vm567 = vcmp.eq.s32.totalorder %v565, 0
        %v568 = vxor.u32 %v562, 2147483648
        %v569 = vsel %vm567, %v561, %v568
        %vm570 = vcmp.eq.s32.totalorder %v565, 2
        %v571 = vxor.u32 %v561, 2147483648
        %v572 = vsel %vm570, %v571, %v562
        %v573 = vsel %vm566, %v569, %v572
        %v574 = vsel %vm563, nan, %v573
        %v575 = vand.u32 2147483647, %v155
        %vm576 = vcmp.le.f32.partialorder %v575, 0.7853982
        %vm577 = vcmp.lt.s32.totalorder %v155, 0
        %v578 = vand.u32 %v155, 2139095040
        %v579 = vshrl.u32 %v578, 23
        %v580 = vsub.s32 %v579, 127
        %v581 = vand.u32 2147483647, %v155
        %v582 = vand.u32 %v581, 8388607
        %v583 = vor.u32 %v582, 8388608
        %v584 = vsub.s32 0, %v583
        %v585 = vadd.s32 %v580, 1
        %vm586 = vcmp.gt.s32.totalorder %v585, 0
        %v587 = vsel %vm586, %v585, 0
        %v588 = vshrl.u32 %v587, 5
        %v589 = vand.u32 %v587, 31
        %v590 = vsub.s32 32, %v589
        %v591 = vshrl.u32 683565275, %v590
        %v592 = vshll.u32 683565275, %v589
        %v593 = vshrl.u32 2475754826, %v590
        %v594 = vor.u32 %v592, %v593
        %v595 = vshll.u32 2475754826, %v589
        %v596 = vshrl.u32 2131351028, %v590
        %v597 = vor.u32 %v595, %v596
        %v598 = vshll.u32 2131351028, %v589
        %v599 = vshrl.u32 2102212464, %v590
        %v600 = vor.u32 %v598, %v599
        %v601 = vshll.u32 2102212464, %v589
        %v602 = vshrl.u32 920167782, %v590
        %v603 = vor.u32 %v601, %v602
        %v604 = vshll.u32 920167782, %v589
        %v605 = vshrl.u32 1326507024, %v590
        %v606 = vor.u32 %v604, %v605
        %vm607 = vcmp.lt.s32.totalorder %v588, 1
        %vm608 = vcmp.lt.s32.totalorder %v588, 2
        %vm609 = vcmp.lt.s32.totalorder %v588, 3
        %vm610 = vcmp.lt.s32.totalorder %v588, 4
        %v611 = vsel %vm607, %v591, %v594
        %v612 = vsel %vm610, %v600, 2102212464
        %v613 = vsel %vm609, %v597, %v612
        %v614 = vsel %vm608, %v611, %v613
        %v615 = vsel %vm607, %v594, %v597
        %v616 = vsel %vm610, %v603, 920167782
        %v617 = vsel %vm609, %v600, %v616
        %v618 = vsel %vm608, %v615, %v617
        %v619 = vsel %vm607, %v597, %v600
        %v620 = vsel %vm610, %v606, 1326507024
        %v621 = vsel %vm609, %v603, %v620
        %v622 = vsel %vm608, %v619, %v621
        %v623 = vshll.u32 %v583, 8
        %v624 = vmul.u32.u64.compose %v623, %v622
        %v625 = vextract.low.u32 %v624
        %v626 = vextract.high.u32 %v624
        %v627 = vmul.u32.u64.compose %v623, %v618
        %v628 = vextract.low.u32 %v627
        %v629 = vextract.high.u32 %v627
        %v630 = vmul.u32 %v623, %v614
        %v631 = vadd.s32 %v626, %v628
        %vm632 = vc.u32 %v626, %v628
        %v633 = vadd.s32 %v629, 1
        %v634 = vsel %vm632, %v633, %v629
        %v635 = vadd.s32 %v630, %v634
        %v636 = vadd.s32 %v635, 536870912
        %v637 = vshrl.u32 %v636, 30
        %v638 = vshll.u32 %v637, 30
        %v639 = vsub.s32 %v635, %v638
        %vm640 = vcmp.lt.s32.totalorder %v639, 0
        %v641 = vsub.s32 0, %v639
        %v642 = vsel %vm640, %v641, %v639
        %v643 = vclz %v642
        %v644 = vsub.s32 %v643, 2
        %vm645 = vcmp.gt.s32.totalorder 0, %v644
        %v646 = vsel %vm645, 0, %v644
        %v647 = vsub.s32 32, %v646
        %v648 = vshll.u32 %v639, %v646
        %v649 = vshrl.u32 %v631, %v647
        %v650 = vor.u32 %v648, %v649
        %v651 = vsub.s32 4294967266, %v646
        %v652 = vadd.s32 %v651, 127
        %v653 = vshll.u32 %v652, 23
        %v654 = vor.u32 4788187, %v653
        %v655 = vand.u32 2147483647, %v654
        %v657 = vcvt.s32.f32 %v650
        %v658 = vmul.f32 %v657, %v655
        %v659 = vxor.u32 %v658, 2147483648
        %v660 = vsel %vm577, %v659, %v658
        %v661 = vsub.s32 4, %v637
        %v662 = vsel %vm577, %v661, %v637
        %v663 = vsel %vm576, %v155, %v660
        %v664 = vsel %vm576, 0, %v662
        %v665 = vcosq.f32.pop %v663
        %v666 = vsinq.f32.pop %v663
        %vm667 = vweird.f32 %v155
        %v668 = vand.u32 %v664, 3
        %vm669 = vcmp.lt.s32.totalorder %v668, 2
        %vm670 = vcmp.eq.s32.totalorder %v668, 0
        %v671 = vxor.u32 %v666, 2147483648
        %v672 = vsel %vm670, %v665, %v671
        %vm673 = vcmp.eq.s32.totalorder %v668, 2
        %v674 = vxor.u32 %v665, 2147483648
        %v675 = vsel %vm673, %v674, %v666
        %v676 = vsel %vm669, %v672, %v675
        %v677 = vsel %vm667, nan, %v676
        %v678 = vand.u32 2147483647, %v156
        %vm679 = vcmp.le.f32.partialorder %v678, 0.7853982
        %vm680 = vcmp.lt.s32.totalorder %v156, 0
        %v681 = vand.u32 %v156, 2139095040
        %v682 = vshrl.u32 %v681, 23
        %v683 = vsub.s32 %v682, 127
        %v684 = vand.u32 2147483647, %v156
        %v685 = vand.u32 %v684, 8388607
        %v686 = vor.u32 %v685, 8388608
        %v687 = vsub.s32 0, %v686
        %v688 = vadd.s32 %v683, 1
        %vm689 = vcmp.gt.s32.totalorder %v688, 0
        %v690 = vsel %vm689, %v688, 0
        %v691 = vshrl.u32 %v690, 5
        %v692 = vand.u32 %v690, 31
        %v693 = vsub.s32 32, %v692
        %v694 = vshrl.u32 683565275, %v693
        %v695 = vshll.u32 683565275, %v692
        %v696 = vshrl.u32 2475754826, %v693
        %v697 = vor.u32 %v695, %v696
        %v698 = vshll.u32 2475754826, %v692
        %v699 = vshrl.u32 2131351028, %v693
        %v700 = vor.u32 %v698, %v699
        %v701 = vshll.u32 2131351028, %v692
        %v702 = vshrl.u32 2102212464, %v693
        %v703 = vor.u32 %v701, %v702
        %v704 = vshll.u32 2102212464, %v692
        %v705 = vshrl.u32 920167782, %v693
        %v706 = vor.u32 %v704, %v705
        %v707 = vshll.u32 920167782, %v692
        %v708 = vshrl.u32 1326507024, %v693
        %v709 = vor.u32 %v707, %v708
        %vm710 = vcmp.lt.s32.totalorder %v691, 1
        %vm711 = vcmp.lt.s32.totalorder %v691, 2
        %vm712 = vcmp.lt.s32.totalorder %v691, 3
        %vm713 = vcmp.lt.s32.totalorder %v691, 4
        %v714 = vsel %vm710, %v694, %v697
        %v715 = vsel %vm713, %v703, 2102212464
        %v716 = vsel %vm712, %v700, %v715
        %v717 = vsel %vm711, %v714, %v716
        %v718 = vsel %vm710, %v697, %v700
        %v719 = vsel %vm713, %v706, 920167782
        %v720 = vsel %vm712, %v703, %v719
        %v721 = vsel %vm711, %v718, %v720
        %v722 = vsel %vm710, %v700, %v703
        %v723 = vsel %vm713, %v709, 1326507024
        %v724 = vsel %vm712, %v706, %v723
        %v725 = vsel %vm711, %v722, %v724
        %v726 = vshll.u32 %v686, 8
        %v727 = vmul.u32.u64.compose %v726, %v725
        %v728 = vextract.low.u32 %v727
        %v729 = vextract.high.u32 %v727
        %v730 = vmul.u32.u64.compose %v726, %v721
        %v731 = vextract.low.u32 %v730
        %v732 = vextract.high.u32 %v730
        %v733 = vmul.u32 %v726, %v717
        %v734 = vadd.s32 %v729, %v731
        %vm735 = vc.u32 %v729, %v731
        %v736 = vadd.s32 %v732, 1
        %v737 = vsel %vm735, %v736, %v732
        %v738 = vadd.s32 %v733, %v737
        %v739 = vadd.s32 %v738, 536870912
        %v740 = vshrl.u32 %v739, 30
        %v741 = vshll.u32 %v740, 30
        %v742 = vsub.s32 %v738, %v741
        %vm743 = vcmp.lt.s32.totalorder %v742, 0
        %v744 = vsub.s32 0, %v742
        %v745 = vsel %vm743, %v744, %v742
        %v746 = vclz %v745
        %v747 = vsub.s32 %v746, 2
        %vm748 = vcmp.gt.s32.totalorder 0, %v747
        %v749 = vsel %vm748, 0, %v747
        %v750 = vsub.s32 32, %v749
        %v751 = vshll.u32 %v742, %v749
        %v752 = vshrl.u32 %v734, %v750
        %v753 = vor.u32 %v751, %v752
        %v754 = vsub.s32 4294967266, %v749
        %v755 = vadd.s32 %v754, 127
        %v756 = vshll.u32 %v755, 23
        %v757 = vor.u32 4788187, %v756
        %v758 = vand.u32 2147483647, %v757
        %v760 = vcvt.s32.f32 %v753
        %v761 = vmul.f32 %v760, %v758
        %v762 = vxor.u32 %v761, 2147483648
        %v763 = vsel %vm680, %v762, %v761
        %v764 = vsub.s32 4, %v740
        %v765 = vsel %vm680, %v764, %v740
        %v766 = vsel %vm679, %v156, %v763
        %v767 = vsel %vm679, 0, %v765
        %v768 = vcosq.f32.pop %v766
        %v769 = vsinq.f32.pop %v766
        %vm770 = vweird.f32 %v156
        %v771 = vand.u32 %v767, 3
        %vm772 = vcmp.lt.s32.totalorder %v771, 2
        %vm773 = vcmp.eq.s32.totalorder %v771, 0
        %v774 = vxor.u32 %v769, 2147483648
        %v775 = vsel %vm773, %v768, %v774
        %vm776 = vcmp.eq.s32.totalorder %v771, 2
        %v777 = vxor.u32 %v768, 2147483648
        %v778 = vsel %vm776, %v777, %v769
        %v779 = vsel %vm772, %v775, %v778
        %v780 = vsel %vm770, nan, %v779
        %v781 = vand.u32 2147483647, %v157
        %vm782 = vcmp.le.f32.partialorder %v781, 0.7853982
        %vm783 = vcmp.lt.s32.totalorder %v157, 0
        %v784 = vand.u32 %v157, 2139095040
        %v785 = vshrl.u32 %v784, 23
        %v786 = vsub.s32 %v785, 127
        %v787 = vand.u32 2147483647, %v157
        %v788 = vand.u32 %v787, 8388607
        %v789 = vor.u32 %v788, 8388608
        %v790 = vsub.s32 0, %v789
        %v791 = vadd.s32 %v786, 1
        %vm792 = vcmp.gt.s32.totalorder %v791, 0
        %v793 = vsel %vm792, %v791, 0
        %v794 = vshrl.u32 %v793, 5
        %v795 = vand.u32 %v793, 31
        %v796 = vsub.s32 32, %v795
        %v797 = vshrl.u32 683565275, %v796
        %v798 = vshll.u32 683565275, %v795
        %v799 = vshrl.u32 2475754826, %v796
        %v800 = vor.u32 %v798, %v799
        %v801 = vshll.u32 2475754826, %v795
        %v802 = vshrl.u32 2131351028, %v796
        %v803 = vor.u32 %v801, %v802
        %v804 = vshll.u32 2131351028, %v795
        %v805 = vshrl.u32 2102212464, %v796
        %v806 = vor.u32 %v804, %v805
        %v807 = vshll.u32 2102212464, %v795
        %v808 = vshrl.u32 920167782, %v796
        %v809 = vor.u32 %v807, %v808
        %v810 = vshll.u32 920167782, %v795
        %v811 = vshrl.u32 1326507024, %v796
        %v812 = vor.u32 %v810, %v811
        %vm813 = vcmp.lt.s32.totalorder %v794, 1
        %vm814 = vcmp.lt.s32.totalorder %v794, 2
        %vm815 = vcmp.lt.s32.totalorder %v794, 3
        %vm816 = vcmp.lt.s32.totalorder %v794, 4
        %v817 = vsel %vm813, %v797, %v800
        %v818 = vsel %vm816, %v806, 2102212464
        %v819 = vsel %vm815, %v803, %v818
        %v820 = vsel %vm814, %v817, %v819
        %v821 = vsel %vm813, %v800, %v803
        %v822 = vsel %vm816, %v809, 920167782
        %v823 = vsel %vm815, %v806, %v822
        %v824 = vsel %vm814, %v821, %v823
        %v825 = vsel %vm813, %v803, %v806
        %v826 = vsel %vm816, %v812, 1326507024
        %v827 = vsel %vm815, %v809, %v826
        %v828 = vsel %vm814, %v825, %v827
        %v829 = vshll.u32 %v789, 8
        %v830 = vmul.u32.u64.compose %v829, %v828
        %v831 = vextract.low.u32 %v830
        %v832 = vextract.high.u32 %v830
        %v833 = vmul.u32.u64.compose %v829, %v824
        %v834 = vextract.low.u32 %v833
        %v835 = vextract.high.u32 %v833
        %v836 = vmul.u32 %v829, %v820
        %v837 = vadd.s32 %v832, %v834
        %vm838 = vc.u32 %v832, %v834
        %v839 = vadd.s32 %v835, 1
        %v840 = vsel %vm838, %v839, %v835
        %v841 = vadd.s32 %v836, %v840
        %v842 = vadd.s32 %v841, 536870912
        %v843 = vshrl.u32 %v842, 30
        %v844 = vshll.u32 %v843, 30
        %v845 = vsub.s32 %v841, %v844
        %vm846 = vcmp.lt.s32.totalorder %v845, 0
        %v847 = vsub.s32 0, %v845
        %v848 = vsel %vm846, %v847, %v845
        %v849 = vclz %v848
        %v850 = vsub.s32 %v849, 2
        %vm851 = vcmp.gt.s32.totalorder 0, %v850
        %v852 = vsel %vm851, 0, %v850
        %v853 = vsub.s32 32, %v852
        %v854 = vshll.u32 %v845, %v852
        %v855 = vshrl.u32 %v837, %v853
        %v856 = vor.u32 %v854, %v855
        %v857 = vsub.s32 4294967266, %v852
        %v858 = vadd.s32 %v857, 127
        %v859 = vshll.u32 %v858, 23
        %v860 = vor.u32 4788187, %v859
        %v861 = vand.u32 2147483647, %v860
        %v863 = vcvt.s32.f32 %v856
        %v864 = vmul.f32 %v863, %v861
        %v865 = vxor.u32 %v864, 2147483648
        %v866 = vsel %vm783, %v865, %v864
        %v867 = vsub.s32 4, %v843
        %v868 = vsel %vm783, %v867, %v843
        %v869 = vsel %vm782, %v157, %v866
        %v870 = vsel %vm782, 0, %v868
        %v871 = vcosq.f32.pop %v869
        %v872 = vsinq.f32.pop %v869
        %vm873 = vweird.f32 %v157
        %v874 = vand.u32 %v870, 3
        %vm875 = vcmp.lt.s32.totalorder %v874, 2
        %vm876 = vcmp.eq.s32.totalorder %v874, 0
        %v877 = vxor.u32 %v872, 2147483648
        %v878 = vsel %vm876, %v871, %v877
        %vm879 = vcmp.eq.s32.totalorder %v874, 2
        %v880 = vxor.u32 %v871, 2147483648
        %v881 = vsel %vm879, %v880, %v872
        %v882 = vsel %vm875, %v878, %v881
        %v883 = vsel %vm873, nan, %v882
        %v884 = vand.u32 2147483647, %v158
        %vm885 = vcmp.le.f32.partialorder %v884, 0.7853982
        %vm886 = vcmp.lt.s32.totalorder %v158, 0
        %v887 = vand.u32 %v158, 2139095040
        %v888 = vshrl.u32 %v887, 23
        %v889 = vsub.s32 %v888, 127
        %v890 = vand.u32 2147483647, %v158
        %v891 = vand.u32 %v890, 8388607
        %v892 = vor.u32 %v891, 8388608
        %v893 = vsub.s32 0, %v892
        %v894 = vadd.s32 %v889, 1
        %vm895 = vcmp.gt.s32.totalorder %v894, 0
        %v896 = vsel %vm895, %v894, 0
        %v897 = vshrl.u32 %v896, 5
        %v898 = vand.u32 %v896, 31
        %v899 = vsub.s32 32, %v898
        %v900 = vshrl.u32 683565275, %v899
        %v901 = vshll.u32 683565275, %v898
        %v902 = vshrl.u32 2475754826, %v899
        %v903 = vor.u32 %v901, %v902
        %v904 = vshll.u32 2475754826, %v898
        %v905 = vshrl.u32 2131351028, %v899
        %v906 = vor.u32 %v904, %v905
        %v907 = vshll.u32 2131351028, %v898
        %v908 = vshrl.u32 2102212464, %v899
        %v909 = vor.u32 %v907, %v908
        %v910 = vshll.u32 2102212464, %v898
        %v911 = vshrl.u32 920167782, %v899
        %v912 = vor.u32 %v910, %v911
        %v913 = vshll.u32 920167782, %v898
        %v914 = vshrl.u32 1326507024, %v899
        %v915 = vor.u32 %v913, %v914
        %vm916 = vcmp.lt.s32.totalorder %v897, 1
        %vm917 = vcmp.lt.s32.totalorder %v897, 2
        %vm918 = vcmp.lt.s32.totalorder %v897, 3
        %vm919 = vcmp.lt.s32.totalorder %v897, 4
        %v920 = vsel %vm916, %v900, %v903
        %v921 = vsel %vm919, %v909, 2102212464
        %v922 = vsel %vm918, %v906, %v921
        %v923 = vsel %vm917, %v920, %v922
        %v924 = vsel %vm916, %v903, %v906
        %v925 = vsel %vm919, %v912, 920167782
        %v926 = vsel %vm918, %v909, %v925
        %v927 = vsel %vm917, %v924, %v926
        %v928 = vsel %vm916, %v906, %v909
        %v929 = vsel %vm919, %v915, 1326507024
        %v930 = vsel %vm918, %v912, %v929
        %v931 = vsel %vm917, %v928, %v930
        %v932 = vshll.u32 %v892, 8
        %v933 = vmul.u32.u64.compose %v932, %v931
        %v934 = vextract.low.u32 %v933
        %v935 = vextract.high.u32 %v933
        %v936 = vmul.u32.u64.compose %v932, %v927
        %v937 = vextract.low.u32 %v936
        %v938 = vextract.high.u32 %v936
        %v939 = vmul.u32 %v932, %v923
        %v940 = vadd.s32 %v935, %v937
        %vm941 = vc.u32 %v935, %v937
        %v942 = vadd.s32 %v938, 1
        %v943 = vsel %vm941, %v942, %v938
        %v944 = vadd.s32 %v939, %v943
        %v945 = vadd.s32 %v944, 536870912
        %v946 = vshrl.u32 %v945, 30
        %v947 = vshll.u32 %v946, 30
        %v948 = vsub.s32 %v944, %v947
        %vm949 = vcmp.lt.s32.totalorder %v948, 0
        %v950 = vsub.s32 0, %v948
        %v951 = vsel %vm949, %v950, %v948
        %v952 = vclz %v951
        %v953 = vsub.s32 %v952, 2
        %vm954 = vcmp.gt.s32.totalorder 0, %v953
        %v955 = vsel %vm954, 0, %v953
        %v956 = vsub.s32 32, %v955
        %v957 = vshll.u32 %v948, %v955
        %v958 = vshrl.u32 %v940, %v956
        %v959 = vor.u32 %v957, %v958
        %v960 = vsub.s32 4294967266, %v955
        %v961 = vadd.s32 %v960, 127
        %v962 = vshll.u32 %v961, 23
        %v963 = vor.u32 4788187, %v962
        %v964 = vand.u32 2147483647, %v963
        %v966 = vcvt.s32.f32 %v959
        %v967 = vmul.f32 %v966, %v964
        %v968 = vxor.u32 %v967, 2147483648
        %v969 = vsel %vm886, %v968, %v967
        %v970 = vsub.s32 4, %v946
        %v971 = vsel %vm886, %v970, %v946
        %v972 = vsel %vm885, %v158, %v969
        %v973 = vsel %vm885, 0, %v971
        %v974 = vcosq.f32.pop %v972
        %v975 = vsinq.f32.pop %v972
        %vm976 = vweird.f32 %v158
        %v977 = vand.u32 %v973, 3
        %vm978 = vcmp.lt.s32.totalorder %v977, 2
        %vm979 = vcmp.eq.s32.totalorder %v977, 0
        %v980 = vxor.u32 %v975, 2147483648
        %v981 = vsel %vm979, %v974, %v980
        %vm982 = vcmp.eq.s32.totalorder %v977, 2
        %v983 = vxor.u32 %v974, 2147483648
        %v984 = vsel %vm982, %v983, %v975
        %v985 = vsel %vm978, %v981, %v984
        %v986 = vsel %vm976, nan, %v985
        %987 = vst [vmem:[#allocation3] sm:$0x7] %v135
        %988 = vst [vmem:[#allocation3 + $0x3] sm:$0x7] %v262
        %989 = vst [vmem:[#allocation3 + $0x6] sm:$0x7] %v677
        %990 = vst [vmem:[#allocation3 + $0x6] sm:$0x38] %v262
        %991 = vst [vmem:[#allocation3 + $0x9] sm:$0x38] %v677
        %992 = vst [vmem:[#allocation3 + $0x9] sm:$0xc0] %v262
        %993 = vst [vmem:[#allocation3 + $0x11] sm:$0x1] %v366
        %994 = vst [vmem:[#allocation3 + $0xc] sm:$0xc0] %v677
        %995 = vst [vmem:[#allocation3 + $0x14] sm:$0x1] %v780
        %996 = vst [vmem:[#allocation3 + $0x14] sm:$0xe] %v366
        %997 = vst [vmem:[#allocation3 + $0x17] sm:$0xe] %v780
        %998 = vst [vmem:[#allocation3 + $0x17] sm:$0x70] %v366
        %999 = vst [vmem:[#allocation3 + $0x1a] sm:$0x70] %v780
        %1000 = vst [vmem:[#allocation3 + $0x1a] sm:$0x80] %v366
        %1001 = vst [vmem:[#allocation3 + $0x22] sm:$0x3] %v470
        %1002 = vst [vmem:[#allocation3 + $0x1d] sm:$0x80] %v780
        %1003 = vst [vmem:[#allocation3 + $0x25] sm:$0x3] %v883
        %1004 = vst [vmem:[#allocation3 + $0x25] sm:$0x1c] %v470
        %1005 = vst [vmem:[#allocation3 + $0x28] sm:$0x1c] %v883
        %1006 = vst [vmem:[#allocation3 + $0x28] sm:$0xe0] %v470
        %1007 = vst [vmem:[#allocation3 + $0x2b] sm:$0xe0] %v883
        %1008 = vst [vmem:[#allocation3 + $0x33] sm:$0x7] %v574
        %1009 = vst [vmem:[#allocation3 + $0x36] sm:$0x7] %v986
        %1010 = vst [vmem:[#allocation3 + $0x36] sm:$0x38] %v574
        %1011 = vst [vmem:[#allocation3 + $0x39] sm:$0x38] %v986
        %1012 = vst [vmem:[#allocation3 + $0x3f] sm:$0x1] 0.0
        %v1013 = vld [vmem:[#allocation3] sm:$0xff]
        %v1014 = vld [vmem:[#allocation3 + $0x8] sm:$0xff]
        %v1015 = vld [vmem:[#allocation3 + $0x10] sm:$0xff]
        %v1016 = vld [vmem:[#allocation3 + $0x18] sm:$0xff]
        %v1017 = vld [vmem:[#allocation3 + $0x20] sm:$0xff]
        %v1018 = vld [vmem:[#allocation3 + $0x28] sm:$0xff]
        %v1019 = vld [vmem:[#allocation3 + $0x30] sm:$0xff]
        %v1020 = vld [vmem:[#allocation3 + $0x38] sm:$0xff]
        %1021 = vxpose.xlu0.b32.start [1/16] %v1013, 128
        %1022 = vxpose.xlu0.b32.cont [2/16] %v1014, 128
        %1023 = vxpose.xlu0.b32.cont [3/16] %v1015, 128
        %1024 = vxpose.xlu0.b32.cont [4/16] %v1016, 128
        %1025 = vxpose.xlu0.b32.cont [5/16] %v1017, 128
        %1026 = vxpose.xlu0.b32.cont [6/16] %v1018, 128
        %1027 = vxpose.xlu0.b32.cont [7/16] %v1019, 128
        %1028 = vxpose.xlu0.b32.cont [8/16] %v1020, 128
        %1029 = vxpose.xlu0.b32.cont [9/16] 0.0, 128
        %1030 = vxpose.xlu0.b32.cont [10/16] 0.0, 128
        %1031 = vxpose.xlu0.b32.cont [11/16] 0.0, 128
        %1032 = vxpose.xlu0.b32.cont [12/16] 0.0, 128
        %1033 = vxpose.xlu0.b32.cont [13/16] 0.0, 128
        %1034 = vxpose.xlu0.b32.cont [14/16] 0.0, 128
        %1035 = vxpose.xlu0.b32.cont [15/16] 0.0, 128
        %1036 = vxpose.xlu0.b32.end [16/16] 0.0, 128
        %v1037 = vpop.trf.xlu0
        %v1038 = vpop.trf.xlu0
        %v1039 = vpop.trf.xlu0
        %v1040 = vpop.trf.xlu0
        %v1041 = vpop.trf.xlu0
        %v1042 = vpop.trf.xlu0
        %v1043 = vpop.trf.xlu0
        %v1044 = vpop.trf.xlu0
        %v1045 = vpop.trf.xlu0
        %v1046 = vpop.trf.xlu0
        %v1047 = vpop.trf.xlu0
        %v1048 = vpop.trf.xlu0
        %v1049 = vpop.trf.xlu0
        %v1050 = vpop.trf.xlu0
        %v1051 = vpop.trf.xlu0
        %v1052 = vpop.trf.xlu0
        %vm1053 = vcmask 515072
        %1054 = vst.msk [vmem:[%s133] sm:$0xff] %vm1053, %v1037
        %1055 = vst.msk [vmem:[%s133 + $0x8] sm:$0xff] %vm1053, %v1038
        %1056 = vst.msk [vmem:[%s133 + $0x10] sm:$0xff] %vm1053, %v1039
        %1057 = vst.msk [vmem:[%s133 + $0x18] sm:$0xff] %vm1053, %v1040
        %1058 = vst.msk [vmem:[%s133 + $0x20] sm:$0xff] %vm1053, %v1041
        %1059 = vst.msk [vmem:[%s133 + $0x28] sm:$0xff] %vm1053, %v1042
        %1060 = vst.msk [vmem:[%s133 + $0x30] sm:$0xff] %vm1053, %v1043
        %1061 = vst.msk [vmem:[%s133 + $0x38] sm:$0xff] %vm1053, %v1044
        %1062 = vst.msk [vmem:[%s133 + $0x40] sm:$0xff] %vm1053, %v1045
        %1063 = vst.msk [vmem:[%s133 + $0x48] sm:$0xff] %vm1053, %v1046
        %1064 = vst.msk [vmem:[%s133 + $0x50] sm:$0xff] %vm1053, %v1047
        %1065 = vst.msk [vmem:[%s133 + $0x58] sm:$0xff] %vm1053, %v1048
        %1066 = vst.msk [vmem:[%s133 + $0x60] sm:$0xff] %vm1053, %v1049
        %1067 = vst.msk [vmem:[%s133 + $0x68] sm:$0xff] %vm1053, %v1050
        %1068 = vst.msk [vmem:[%s133 + $0x70] sm:$0xff] %vm1053, %v1051
        %1069 = vst.msk [vmem:[%s133 + $0x78] sm:$0xff] %vm1053, %v1052
        %s1070 = smul.u32 16, %s15
        %p1071 = scmp.lt.s32.totalorder %s1070, 31
        %s1072 = scalar_select %p1071, %s1070, 31
        %s1073 = smul.addr %s1072, 8
        %s1074 = scalar_lea.vmem %s1, %s1073
        // Predicated region
        $region29: #{positional_encoder.1} parent=23 // pred_check
          %p1075 = pneg %p59
        $region30: #{positional_encoder.1} parent=23 // pred_check_branch
          %1077 = sbr.rel (%p1075) target = $region32
        $region31: #{positional_encoder.1} parent=23 // pred_region
          %s1078 = smul.u32 16, %s15
        $region32: #{positional_encoder.1} parent=23 // pred_fallthru
          _
      $region24: #{positional_encoder.1} parent=5 // pred_fallthru
        _
      %p1079 = scmp.le.s32.totalorder 2, %s10
      // Predicated region
      $region33: #{positional_encoder.1} parent=5 // pred_check
        %p1080 = pneg %p1079
      $region34: #{positional_encoder.1} parent=5 // pred_check_branch
        %1082 = sbr.rel (%p1080) target = $region36
      $region35: #{positional_encoder.1} parent=5 // pred_region
        %s1083 = ssub.s32 %s10, 2
        // Predicated region
        $region37: #{positional_encoder.1} parent=35 // pred_check
          %p1084 = pneg %p65
        $region38: #{positional_encoder.1} parent=35 // pred_check_branch
          %1086 = sbr.rel (%p1084) target = $region40
        $region39: #{positional_encoder.1} parent=35 // pred_region
          %s1087 = smul.u32 16, %s16
          %p1088 = scmp.lt.s32.totalorder %s1087, 31
          %s1089 = scalar_select %p1088, %s1087, 31
          %s1090 = smul.addr %s1089, 8
          %s1091 = scalar_lea.vmem %s1, %s1090
        $region40: #{positional_encoder.1} parent=35 // pred_fallthru
          _
      $region36: #{positional_encoder.1} parent=5 // pred_fallthru
        _
    $region6: #{positional_encoder.1} parent=1 // loop_footer
      %s14 = sadd.s32 1, %s10
    $region7: #{positional_encoder.1} parent=1 // loop_footer_branch
      %9 = sbr.rel target = $region3
    $region8: #{positional_encoder.1} parent=1 // loop_exit
      _
    %1092 = vsyncpa [#allocation5], 1
    %s1093 = scalar_lea.sflag [#allocation5], 1
    %1094 = vsyncpa %s1093, 1

</llo_original>
